<compile_context>
chip_gen: v7x
topology: tpu7x:2x2x1
jax: 0.10.0
libtpu: 0.0.40
codegen_flags: <defaults>
</compile_context>

<pallas_src>
import jax
import jax.numpy as jnp
from jax.experimental import pallas as pl
from jax.experimental.pallas import tpu as pltpu


def _round_up(x, m):
    return ((x + m - 1) // m) * m


# ----------------------------------------------------------------------------
# Kernel
# ----------------------------------------------------------------------------
def _v2v_kernel(adj_ref, x_ref, w_v2e_t_ref, b_v2e_ref, w_cat_t_ref, b_e2v_ref,
                out_ref):
    """Grid = (batch_blocks, e_blocks); E axis is a cross-tile reduction.

    out_ref doubles as the f32 accumulator for the hyperedge->vertex message
    (its block index is constant along the E axis, so it stays VMEM-resident),
    and is overwritten in place by the concat-linear + relu on the last E tile.
    """
    e_step = pl.program_id(1)
    tb = adj_ref.shape[0]                       # batch elements per grid step

    # ---- init the resident accumulator at the first E tile ----
    @pl.when(e_step == 0)
    def _init():
        out_ref[...] = jnp.zeros_like(out_ref)

    # Invariant operands: load once per step, outside the per-batch loop.
    w_v2e_t = w_v2e_t_ref[...]                  # (Fp, Fp) bf16
    b_v2e = b_v2e_ref[...]                      # (1, Fp)  f32

    def _accum_body(b, carry):
        # bf16 masks directly from int8 adj ({-1,0,1} exact in bf16):
        adj_b = adj_ref[b].astype(jnp.bfloat16)            # (TE, Vp)
        adj_tgt = jnp.maximum(-adj_b, 0)                    # mask of (adj == -1)
        adj_src = jnp.maximum(adj_b, 0)                     # mask of (adj == +1)

        # per-hyperedge in-degree (exact f32 accumulation), clamp 0 -> 1
        norm = jnp.sum(adj_tgt, axis=-1, keepdims=True, dtype=jnp.float32)
        inv_norm = pl.reciprocal(jnp.maximum(norm, 1.0), approx=True)

        x_b = x_ref[b]                                      # (Vp, Fp) bf16

        # ---- vertex -> hyperedge (this E tile only) ----
        msg_v = jnp.dot(adj_tgt, x_b,
                        preferred_element_type=jnp.float32) * inv_norm   # (TE, Fp)
        he = jnp.maximum(
            jnp.dot(msg_v.astype(jnp.bfloat16), w_v2e_t,
                    preferred_element_type=jnp.float32) + b_v2e, 0.0)    # (TE, Fp)

        # ---- hyperedge -> vertex message, accumulated over E tiles ----
        # transposed-LHS contraction (dim 0 of both operands): MXU-native feed,
        # no explicit transpose of the large (TE, Vp) mask.
        contrib = jax.lax.dot_general(
            adj_src, he.astype(jnp.bfloat16),
            (((0,), (0,)), ((), ())),
            preferred_element_type=jnp.float32)                          # (Vp, Fp)
        out_ref[b] += contrib
        return carry

    jax.lax.fori_loop(0, tb, _accum_body, 0, unroll=True)

    # ---- finalize on the last E tile: fused concat-linear + relu ----
    @pl.when(e_step == pl.num_programs(1) - 1)
    def _finalize():
        w_cat_t = w_cat_t_ref[...]              # (2Fp, Fp) bf16
        b_e2v = b_e2v_ref[...]                  # (1, Fp)   f32

        def _fin_body(b, carry):
            x_b = x_ref[b]                                   # (Vp, Fp) bf16
            msg_b = out_ref[b].astype(jnp.bfloat16)          # (Vp, Fp)
            cat = jnp.concatenate([x_b, msg_b], axis=-1)     # (Vp, 2Fp), K=2Fp
            out_b = jnp.maximum(
                jnp.dot(cat, w_cat_t, preferred_element_type=jnp.float32)
                + b_e2v, 0.0)
            out_ref[b] = out_b.astype(out_ref.dtype)
            return carry

        jax.lax.fori_loop(0, tb, _fin_body, 0, unroll=True)


# ----------------------------------------------------------------------------
# Tile selection from an explicit VMEM byte budget
# ----------------------------------------------------------------------------
def _vmem_limit_bytes():
    try:
        cap = int(pltpu.get_tpu_info().vmem_capacity_bytes)
    except Exception:
        cap = 64 * 1024 * 1024          # conservative (v7x per-core) fallback
    # leave scheduling / compiler headroom
    return min(int(cap * 0.85), cap - (8 << 20))


def _pick_tiles(B, E, Vp, Fp, vmem_budget, tb_max=8, te_max=2048):
    # --- batch tile: >= 2 batch blocks whenever B >= 2 (v7x megacore),
    #     minimal padding waste in the last block ---
    tb_cap = max(1, (B + 1) // 2) if B >= 2 else 1
    tb_cap = min(tb_cap, tb_max, max(B, 1))
    tb, best_waste = 1, None
    for t in range(1, tb_cap + 1):
        waste = (-B) % t
        if best_waste is None or waste < best_waste or (waste == best_waste and t > tb):
            tb, best_waste = t, waste

    def _te_for(tb_):
        fixed = tb_ * Vp * Fp * 2                 # x block (bf16, single-buffered)
        fixed += 2 * tb_ * Vp * Fp * 4            # out block (f32, double-buffered)
        fixed += 3 * Fp * Fp * 2 + 8 * Fp + (1 << 16)   # weights + biases + slack
        per_te = 2 * tb_ * Vp                     # adj (int8, double-buffered)
        per_te += 3 * Vp * 2                      # live bf16 mask temps
        per_te += Fp * 16                         # msg_v / he f32+bf16 temps
        avail = vmem_budget - fixed
        return 0 if avail <= 0 else int(avail // per_te)

    te = _te_for(tb)
    while te < 32 and tb > 1:                     # shrink batch block if too tight
        tb = max(1, tb // 2)
        te = _te_for(tb)
    te = max(32, (te // 32) * 32)                 # int8 sublane-pack granularity
    te = min(te, _round_up(max(E, 1), 32), te_max)
    return tb, te


# ----------------------------------------------------------------------------
# Wrapper
# ----------------------------------------------------------------------------
def vertex2vertex(node_embeddings, adj, params):
    """node_embeddings: (B, V, F) f32, adj: (B, E, V) f32 with values in {-1,0,1}."""
    B, V, F = node_embeddings.shape
    _, E, _ = adj.shape

    Fp = _round_up(F, 128)                       # lane-dense feature dim
    Vp = _round_up(V, 128)

    vmem_limit = _vmem_limit_bytes()
    TB, TE = _pick_tiles(B, E, Vp, Fp, int(vmem_limit * 0.9))
    Bp = _round_up(B, TB)
    Ep = _round_up(E, TE)

    # ---- pad inputs; zero padding is semantically inert (zero adj entries hit
    #      neither mask, padded hyperedges scatter nothing, padded rows/cols
    #      are sliced off on return) ----
    x_p = jnp.zeros((Bp, Vp, Fp), jnp.bfloat16)
    x_p = x_p.at[:B, :V, :F].set(node_embeddings.astype(jnp.bfloat16))
    adj_p = jnp.zeros((Bp, Ep, Vp), jnp.int8)
    adj_p = adj_p.at[:B, :E, :V].set(adj.astype(jnp.int8))

    # ---- weights: pre-transposed, zero-padded, bf16 (MXU-native) ----
    w_v2e_t = jnp.zeros((Fp, Fp), jnp.bfloat16)
    w_v2e_t = w_v2e_t.at[:F, :F].set(params["w_v2e"].T.astype(jnp.bfloat16))
    # fused concat weight: rows [0:F) act on x, rows [Fp:Fp+F) act on msg
    w_cat_t = jnp.zeros((2 * Fp, Fp), jnp.bfloat16)
    w_cat_t = w_cat_t.at[:F, :F].set(params["w_e2v"][:, :F].T.astype(jnp.bfloat16))
    w_cat_t = w_cat_t.at[Fp:Fp + F, :F].set(
        params["w_e2v"][:, F:].T.astype(jnp.bfloat16))
    b_v2e = jnp.zeros((1, Fp), jnp.float32).at[0, :F].set(params["b_v2e"])
    b_e2v = jnp.zeros((1, Fp), jnp.float32).at[0, :F].set(params["b_e2v"])

    grid = (Bp // TB, Ep // TE)
    const_map = lambda b, e: (0, 0)

    out_p = pl.pallas_call(
        _v2v_kernel,
        out_shape=jax.ShapeDtypeStruct((Bp, Vp, Fp), jnp.float32),
        grid_spec=pltpu.PrefetchScalarGridSpec(
            num_scalar_prefetch=0,
            grid=grid,
            in_specs=[
                # adj streams as int8 (dominant HBM traffic), double-buffered
                pl.BlockSpec((TB, TE, Vp), lambda b, e: (b, e, 0)),
                # x only changes on the batch axis -> single buffer saves VMEM
                pl.BlockSpec((TB, Vp, Fp), lambda b, e: (b, 0, 0),
                             pipeline_mode=pl.Buffered(1)),
                # invariant weights / biases: single-buffered
                pl.BlockSpec((Fp, Fp), const_map, pipeline_mode=pl.Buffered(1)),
                pl.BlockSpec((1, Fp), const_map, pipeline_mode=pl.Buffered(1)),
                pl.BlockSpec((2 * Fp, Fp), const_map, pipeline_mode=pl.Buffered(1)),
                pl.BlockSpec((1, Fp), const_map, pipeline_mode=pl.Buffered(1)),
            ],
            out_specs=pl.BlockSpec((TB, Vp, Fp), lambda b, e: (b, 0, 0)),
        ),
        compiler_params=pltpu.CompilerParams(
            dimension_semantics=("parallel", "arbitrary"),
            vmem_limit_bytes=vmem_limit,
        ),
    )(adj_p, x_p, w_v2e_t, b_v2e, w_cat_t, b_e2v)

    return out_p[:B, :V, :F]


# ----------------------------------------------------------------------------
# Pure-JAX reference (mirrors the PyTorch forward in f32)
# ----------------------------------------------------------------------------
def vertex2vertex_ref(x, adj, params):
    F = x.shape[-1]
    adj_tgt = (adj == -1.0).astype(jnp.float32)
    norm = jnp.sum(adj_tgt, axis=-1, keepdims=True)
    norm = jnp.where(norm == 0.0, 1.0, norm)
    msg_v = jnp.matmul(adj_tgt, x) / norm
    he = jax.nn.relu(msg_v @ params["w_v2e"].T + params["b_v2e"])
    adj_T = jnp.swapaxes(adj, 1, 2)
    adj_src = (adj_T == 1.0).astype(jnp.float32)
    msg_he = jnp.matmul(adj_src, he)
    cat = jnp.concatenate([x, msg_he], axis=-1)
    return jax.nn.relu(cat @ params["w_e2v"].T + params["b_e2v"])


if __name__ == "__main__":
    B, V, E, F = 2, 16, 8, 32
    key = jax.random.PRNGKey(0)
    k1, k2, k3, k4, k5, k6 = jax.random.split(key, 6)

    x = jax.random.normal(k1, (B, V, F), dtype=jnp.float32)
    # adj entries in {-1, 0, 1}
    adj = (jax.random.randint(k2, (B, E, V), minval=-1, maxval=2)
           .astype(jnp.float32))

    params = {
        "w_v2e": 0.1 * jax.random.normal(k3, (F, F), dtype=jnp.float32),
        "b_v2e": 0.01 * jax.random.normal(k4, (F,), dtype=jnp.float32),
        "w_e2v": 0.1 * jax.random.normal(k5, (F, 2 * F), dtype=jnp.float32),
        "b_e2v": 0.01 * jax.random.normal(k6, (F,), dtype=jnp.float32),
    }

    out = vertex2vertex(x, adj, params)
    out = jax.block_until_ready(out)

    ref = vertex2vertex_ref(x, adj, params)
    assert out.shape == (B, V, F)
    max_err = float(jnp.max(jnp.abs(out - ref)))
    # bf16 MXU operands + approx reciprocal, f32 accumulation -> small error
    assert jnp.allclose(out, ref, atol=2e-2, rtol=2e-2), max_err

    print("KERNEL_OK")
</pallas_src>

<mosaic_0001>
module attributes {stable_mosaic.version = 11 : i64} {
  func.func @_v2v_kernel(%arg0: i32, %arg1: i32, %arg2: memref<1x32x128xi8, #tpu.memory_space<vmem>>, %arg3: memref<1x128x128xbf16, #tpu.memory_space<vmem>>, %arg4: memref<128x128xbf16, #tpu.memory_space<vmem>>, %arg5: memref<1x128xf32, #tpu.memory_space<vmem>>, %arg6: memref<256x128xbf16, #tpu.memory_space<vmem>>, %arg7: memref<1x128xf32, #tpu.memory_space<vmem>>, %arg8: memref<1x128x128xf32, #tpu.memory_space<vmem>>) attributes {dimension_semantics = [#tpu.dimension_semantics<parallel>, #tpu.dimension_semantics<arbitrary>], iteration_bounds = array<i64: 2, 1>, scalar_prefetch = 0 : i64, scratch_operands = 0 : i64, tpu.core_type = #tpu.core_type<tc>, window_params = [{transform_indices = @transform_0, window_bounds = array<i64: 1, 32, 128>}, {pipeline_mode = #tpu.pipeline_mode<synchronous>, transform_indices = @transform_1, window_bounds = array<i64: 1, 128, 128>}, {pipeline_mode = #tpu.pipeline_mode<synchronous>, transform_indices = @transform_2, window_bounds = array<i64: 128, 128>}, {pipeline_mode = #tpu.pipeline_mode<synchronous>, transform_indices = @transform_3, window_bounds = array<i64: 1, 128>}, {pipeline_mode = #tpu.pipeline_mode<synchronous>, transform_indices = @transform_4, window_bounds = array<i64: 256, 128>}, {pipeline_mode = #tpu.pipeline_mode<synchronous>, transform_indices = @transform_5, window_bounds = array<i64: 1, 128>}, {transform_indices = @transform_6, window_bounds = array<i64: 1, 128, 128>}]} {
    %c0_i32 = arith.constant 0 : i32
    %0 = arith.cmpi eq, %arg1, %c0_i32 : i32
    %1 = arith.extui %0 : i1 to i32
    %c0_i32_0 = arith.constant 0 : i32
    %2 = arith.cmpi ne, %1, %c0_i32_0 : i32
    scf.if %2 {
      %cst_23 = arith.constant 0.000000e+00 : f32
      %46 = vector.broadcast %cst_23 : f32 to vector<1x128x128xf32>
      %c0_24 = arith.constant 0 : index
      %c0_25 = arith.constant 0 : index
      %c0_26 = arith.constant 0 : index
      %47 = vector.load %arg8[%c0_24, %c0_25, %c0_26] : memref<1x128x128xf32, #tpu.memory_space<vmem>>, vector<1x128x128xf32>
      tpu.vector_store %arg8[%c0_24, %c0_25, %c0_26], %46 {strides = array<i32>} : memref<1x128x128xf32, #tpu.memory_space<vmem>>, vector<1x128x128xf32>,
    } else {
    }
    %c0 = arith.constant 0 : index
    %c0_1 = arith.constant 0 : index
    %3 = vector.load %arg4[%c0, %c0_1] : memref<128x128xbf16, #tpu.memory_space<vmem>>, vector<128x128xbf16>
    %c0_2 = arith.constant 0 : index
    %c0_3 = arith.constant 0 : index
    %4 = vector.load %arg5[%c0_2, %c0_3] : memref<1x128xf32, #tpu.memory_space<vmem>>, vector<1x128xf32>
    %c0_i32_4 = arith.constant 0 : i32
    %5 = arith.index_cast %c0_i32_4 : i32 to index
    %c0_5 = arith.constant 0 : index
    %c0_6 = arith.constant 0 : index
    %6 = vector.load %arg2[%5, %c0_5, %c0_6] : memref<1x32x128xi8, #tpu.memory_space<vmem>>, vector<1x32x128xi8>
    %7 = vector.shape_cast %6 : vector<1x32x128xi8> to vector<32x128xi8>
    %8 = arith.sitofp %7 : vector<32x128xi8> to vector<32x128xbf16>
    %cst = arith.constant 0.000000e+00 : bf16
    %9 = vector.broadcast %cst : bf16 to vector<32x128xbf16>
    %10 = arith.subf %9, %8 : vector<32x128xbf16>
    %cst_7 = arith.constant 0.000000e+00 : bf16
    %11 = vector.broadcast %cst_7 : bf16 to vector<32x128xbf16>
    %12 = arith.maximumf %10, %11 : vector<32x128xbf16>
    %cst_8 = arith.constant 0.000000e+00 : bf16
    %13 = vector.broadcast %cst_8 : bf16 to vector<32x128xbf16>
    %14 = arith.maximumf %8, %13 : vector<32x128xbf16>
    %15 = arith.extf %12 : vector<32x128xbf16> to vector<32x128xf32>
    %cst_9 = arith.constant dense<0.000000e+00> : vector<32xf32>
    %16 = vector.multi_reduction <add>, %15, %cst_9 [1] : vector<32x128xf32> to vector<32xf32>
    %17 = vector.shape_cast %16 : vector<32xf32> to vector<32x1xf32>
    %cst_10 = arith.constant 1.000000e+00 : f32
    %18 = vector.broadcast %cst_10 : f32 to vector<32x1xf32>
    %19 = arith.maximumf %17, %18 : vector<32x1xf32>
    %20 = tpu.reciprocal %19 {approx = true} : vector<32x1xf32> -> vector<32x1xf32>
    %21 = arith.index_cast %c0_i32_4 : i32 to index
    %c0_11 = arith.constant 0 : index
    %c0_12 = arith.constant 0 : index
    %22 = vector.load %arg3[%21, %c0_11, %c0_12] : memref<1x128x128xbf16, #tpu.memory_space<vmem>>, vector<1x128x128xbf16>
    %23 = vector.shape_cast %22 : vector<1x128x128xbf16> to vector<128x128xbf16>
    %cst_13 = arith.constant dense<0.000000e+00> : vector<32x128xf32>
    %24 = tpu.matmul %12, %23, %cst_13 {dimension_numbers = #tpu.dot_dimension_numbers<[1], [0], [0], [1], [0, 0, 1, 1], [], []>} : vector<32x128xbf16>, vector<128x128xbf16>, vector<32x128xf32> -> vector<32x128xf32>
    %25 = vector.broadcast %20 : vector<32x1xf32> to vector<32x128xf32>
    %26 = arith.mulf %24, %25 : vector<32x128xf32>
    %27 = arith.truncf %26 : vector<32x128xf32> to vector<32x128xbf16>
    %cst_14 = arith.constant dense<0.000000e+00> : vector<32x128xf32>
    %28 = tpu.matmul %27, %3, %cst_14 {dimension_numbers = #tpu.dot_dimension_numbers<[1], [0], [0], [1], [0, 0, 1, 1], [], []>} : vector<32x128xbf16>, vector<128x128xbf16>, vector<32x128xf32> -> vector<32x128xf32>
    %29 = vector.broadcast %4 : vector<1x128xf32> to vector<32x128xf32>
    %30 = arith.addf %28, %29 : vector<32x128xf32>
    %cst_15 = arith.constant 0.000000e+00 : f32
    %31 = vector.broadcast %cst_15 : f32 to vector<32x128xf32>
    %32 = arith.maximumf %30, %31 : vector<32x128xf32>
    %33 = arith.truncf %32 : vector<32x128xf32> to vector<32x128xbf16>
    %cst_16 = arith.constant dense<0.000000e+00> : vector<128x128xf32>
    %34 = tpu.matmul %14, %33, %cst_16 {dimension_numbers = #tpu.dot_dimension_numbers<[0], [0], [1], [1], [0, 1, 1, 1], [], []>} : vector<32x128xbf16>, vector<32x128xbf16>, vector<128x128xf32> -> vector<128x128xf32>
    %35 = arith.index_cast %c0_i32_4 : i32 to index
    %c0_17 = arith.constant 0 : index
    %c0_18 = arith.constant 0 : index
    %36 = vector.load %arg8[%35, %c0_17, %c0_18] : memref<1x128x128xf32, #tpu.memory_space<vmem>>, vector<1x128x128xf32>
    %37 = vector.shape_cast %36 : vector<1x128x128xf32> to vector<128x128xf32>
    %38 = arith.addf %37, %34 : vector<128x128xf32>
    %39 = arith.index_cast %c0_i32_4 : i32 to index
    %c0_19 = arith.constant 0 : index
    %c0_20 = arith.constant 0 : index
    %40 = vector.load %arg8[%39, %c0_19, %c0_20] : memref<1x128x128xf32, #tpu.memory_space<vmem>>, vector<1x128x128xf32>
    %41 = vector.shape_cast %40 : vector<1x128x128xf32> to vector<128x128xf32>
    %42 = vector.shape_cast %38 : vector<128x128xf32> to vector<1x128x128xf32>
    tpu.vector_store %arg8[%39, %c0_19, %c0_20], %42 {strides = array<i32>} : memref<1x128x128xf32, #tpu.memory_space<vmem>>, vector<1x128x128xf32>,
    %c1_i32 = arith.constant 1 : i32
    %c0_i32_21 = arith.constant 0 : i32
    %43 = arith.cmpi eq, %arg1, %c0_i32_21 : i32
    %44 = arith.extui %43 : i1 to i32
    %c0_i32_22 = arith.constant 0 : i32
    %45 = arith.cmpi ne, %44, %c0_i32_22 : i32
    scf.if %45 {
      %c0_23 = arith.constant 0 : index
      %c0_24 = arith.constant 0 : index
      %46 = vector.load %arg6[%c0_23, %c0_24] : memref<256x128xbf16, #tpu.memory_space<vmem>>, vector<256x128xbf16>
      %c0_25 = arith.constant 0 : index
      %c0_26 = arith.constant 0 : index
      %47 = vector.load %arg7[%c0_25, %c0_26] : memref<1x128xf32, #tpu.memory_space<vmem>>, vector<1x128xf32>
      %c0_i32_27 = arith.constant 0 : i32
      %48 = arith.index_cast %c0_i32_27 : i32 to index
      %c0_28 = arith.constant 0 : index
      %c0_29 = arith.constant 0 : index
      %49 = vector.load %arg3[%48, %c0_28, %c0_29] : memref<1x128x128xbf16, #tpu.memory_space<vmem>>, vector<1x128x128xbf16>
      %50 = vector.shape_cast %49 : vector<1x128x128xbf16> to vector<128x128xbf16>
      %51 = arith.index_cast %c0_i32_27 : i32 to index
      %c0_30 = arith.constant 0 : index
      %c0_31 = arith.constant 0 : index
      %52 = vector.load %arg8[%51, %c0_30, %c0_31] : memref<1x128x128xf32, #tpu.memory_space<vmem>>, vector<1x128x128xf32>
      %53 = vector.shape_cast %52 : vector<1x128x128xf32> to vector<128x128xf32>
      %54 = arith.truncf %53 : vector<128x128xf32> to vector<128x128xbf16>
      %55 = tpu.concatenate %50, %54 in 1 : vector<128x128xbf16>, vector<128x128xbf16> -> vector<128x256xbf16>
      %cst_32 = arith.constant dense<0.000000e+00> : vector<128x128xf32>
      %56 = tpu.matmul %55, %46, %cst_32 {dimension_numbers = #tpu.dot_dimension_numbers<[1], [0], [0], [1], [0, 0, 1, 1], [], []>} : vector<128x256xbf16>, vector<256x128xbf16>, vector<128x128xf32> -> vector<128x128xf32>
      %57 = vector.broadcast %47 : vector<1x128xf32> to vector<128x128xf32>
      %58 = arith.addf %56, %57 : vector<128x128xf32>
      %cst_33 = arith.constant 0.000000e+00 : f32
      %59 = vector.broadcast %cst_33 : f32 to vector<128x128xf32>
      %60 = arith.maximumf %58, %59 : vector<128x128xf32>
      %61 = arith.index_cast %c0_i32_27 : i32 to index
      %c0_34 = arith.constant 0 : index
      %c0_35 = arith.constant 0 : index
      %62 = vector.load %arg8[%61, %c0_34, %c0_35] : memref<1x128x128xf32, #tpu.memory_space<vmem>>, vector<1x128x128xf32>
      %63 = vector.shape_cast %62 : vector<1x128x128xf32> to vector<128x128xf32>
      %64 = vector.shape_cast %60 : vector<128x128xf32> to vector<1x128x128xf32>
      tpu.vector_store %arg8[%61, %c0_34, %c0_35], %64 {strides = array<i32>} : memref<1x128x128xf32, #tpu.memory_space<vmem>>, vector<1x128x128xf32>,
      %c1_i32_36 = arith.constant 1 : i32
    } else {
    }
    return
  }
  func.func @transform_0(%arg0: i32, %arg1: i32) -> (i32, i32, i32) {
    %c0_i32 = arith.constant 0 : i32
    %c0_i32_0 = arith.constant 0 : i32
    return %arg0, %arg1, %c0_i32 : i32, i32, i32
  }
  func.func @transform_1(%arg0: i32, %arg1: i32) -> (i32, i32, i32) {
    %c0_i32 = arith.constant 0 : i32
    %c0_i32_0 = arith.constant 0 : i32
    %c0_i32_1 = arith.constant 0 : i32
    return %arg0, %c0_i32, %c0_i32_0 : i32, i32, i32
  }
  func.func @transform_2(%arg0: i32, %arg1: i32) -> (i32, i32) {
    %c0_i32 = arith.constant 0 : i32
    %c0_i32_0 = arith.constant 0 : i32
    %c0_i32_1 = arith.constant 0 : i32
    return %c0_i32, %c0_i32_0 : i32, i32
  }
  func.func @transform_3(%arg0: i32, %arg1: i32) -> (i32, i32) {
    %c0_i32 = arith.constant 0 : i32
    %c0_i32_0 = arith.constant 0 : i32
    %c0_i32_1 = arith.constant 0 : i32
    return %c0_i32, %c0_i32_0 : i32, i32
  }
  func.func @transform_4(%arg0: i32, %arg1: i32) -> (i32, i32) {
    %c0_i32 = arith.constant 0 : i32
    %c0_i32_0 = arith.constant 0 : i32
    %c0_i32_1 = arith.constant 0 : i32
    return %c0_i32, %c0_i32_0 : i32, i32
  }
  func.func @transform_5(%arg0: i32, %arg1: i32) -> (i32, i32) {
    %c0_i32 = arith.constant 0 : i32
    %c0_i32_0 = arith.constant 0 : i32
    %c0_i32_1 = arith.constant 0 : i32
    return %c0_i32, %c0_i32_0 : i32, i32
  }
  func.func @transform_6(%arg0: i32, %arg1: i32) -> (i32, i32, i32) {
    %c0_i32 = arith.constant 0 : i32
    %c0_i32_0 = arith.constant 0 : i32
    %c0_i32_1 = arith.constant 0 : i32
    return %arg0, %c0_i32, %c0_i32_0 : i32, i32, i32
  }
}

</mosaic_0001>

<llo_original>
// kernel: tpu_custom_call.1
$region0: #{tpu_custom_call.1}
  #allocation0 [shape = 'u32[]', space=smem, size = 0x4, offset = 0x4, fixed_abs, tag = 'smem constant byte address 0x4 - core index']
  #allocation1 [shape = 'u32[144,128]{1,0:T(1,128)}', space=vmem, size = 0x12000, scoped, tag = 'internal scratch']
  %s0 = inlined_call_operand.hbm [shape: s8[2,32,128], index: 0, kind: input, shape index: {}]
  %s1 = inlined_call_operand.hbm [shape: bf16[2,128,128], index: 1, kind: input, shape index: {}]
  %s2 = inlined_call_operand.hbm [shape: bf16[128,128], index: 2, kind: input, shape index: {}]
  %s3 = inlined_call_operand.vmem [shape: f32[1,128], index: 3, kind: input, shape index: {}]
  %s4 = inlined_call_operand.hbm [shape: bf16[256,128], index: 4, kind: input, shape index: {}]
  %s5 = inlined_call_operand.vmem [shape: f32[1,128], index: 5, kind: input, shape index: {}]
  %s6 = inlined_call_operand.hbm [shape: f32[2,128,128], index: 6, kind: output, shape index: {}]
  %s7 = sld [smem:[#allocation0]]
  $region81: #{tpu_custom_call.1} parent=0
    _
  %s9 = ssub.s32 1, %s7
  %s10 = scalar_select 0, %s9, %s7
  $region1: #{tpu_custom_call.1} parent=0
    #allocation2 [shape = 'u8[8192]{0}', space=vmem, size = 0x2000, scoped, tag = 'input window, operand 0']
    #allocation3 [shape = 's32[2]{0}', space=sflag, size = 0x8, scoped, tag = 'scoped memory for tpu_custom_call.1']
    #allocation4 [shape = 's32[2]{0}', space=sflag, size = 0x8, scoped, tag = 'scoped memory for tpu_custom_call.1']
    #allocation5 [shape = 'u8[32768]{0}', space=vmem, size = 0x8000, scoped, tag = 'input window, operand 1, single buffered']
    #allocation6 [shape = 's32[1]{0}', space=sflag, size = 0x4, scoped, tag = 'scoped memory for tpu_custom_call.1']
    #allocation7 [shape = 'u8[32768]{0}', space=vmem, size = 0x8000, scoped, tag = 'input window, operand 2, single buffered']
    #allocation8 [shape = 'u8[65536]{0}', space=vmem, size = 0x10000, scoped, tag = 'input window, operand 4, single buffered']
    #allocation9 [shape = 's32[1]{0}', space=sflag, size = 0x4, scoped, tag = 'scoped memory for tpu_custom_call.1']
    #allocation10 [shape = 'u8[131072]{0}', space=vmem, size = 0x20000, scoped, tag = 'output window, operand 0']
    %11 = vsyncpa [#allocation3], 0
    %s12 = scalar_lea.sflag [#allocation3], 1
    %13 = vsyncpa %s12, 0
    %14 = vsyncpa [#allocation6], 0
    %15 = vsyncpa [#allocation9], 0
    %16 = vsyncpa [#allocation4], 0
    %s17 = scalar_lea.sflag [#allocation4], 1
    %18 = vsyncpa %s17, 0
    loop: start=0, step=1, limit=4
    $region2: #{tpu_custom_call.1} parent=1 // loop_pre_header
      _
    $region3: #{tpu_custom_call.1} parent=1 // loop_header
      %s20 = sphi 0, %s24
      %p21 = scmp.ge.s32.totalorder %s20, 4
      %s27 = sphi 0, %s39
      %s28 = sphi 0, %s35
      %s29 = sphi 0, %s27
      %s30 = sphi 0, %s28
      %s31 = sphi 0, %s29
      %s32 = sphi 0, %s30
      %s44 = sphi 0, %s46
      %s47 = sphi 0, %s44
      %s48 = sphi 0, %s47
      %s64 = sphi 0, %s48
      %s70 = sphi 0, %s72
      %s73 = sphi 0, %s70
      %s74 = sphi 0, %s73
      %s90 = sphi 0, %s74
      %s94 = sphi 0, %s94
      %s96 = sphi 0, %s94
      %s97 = sphi 0, %s96
      %s111 = sphi 0, %s97
      %s115 = sphi 0, %s115
      %s117 = sphi 0, %s115
      %s118 = sphi 0, %s117
      %s132 = sphi 0, %s118
      %s136 = sphi 0, %s136
      %s138 = sphi 0, %s136
      %s139 = sphi 0, %s138
      %s153 = sphi 0, %s139
      %s157 = sphi 0, %s157
      %s159 = sphi 0, %s157
      %s160 = sphi 0, %s159
      %s174 = sphi 0, %s160
      %s180 = sphi 0, %s182
      %s183 = sphi 0, %s180
      %s184 = sphi 0, %s183
      %s200 = sphi 0, %s184
    $region4: #{tpu_custom_call.1} parent=1 // loop_header_branch
      %23 = sbr.rel (%p21) target = $region8
    $region5: #{tpu_custom_call.1} parent=1 // loop_body
      %s25 = ssub.s32 %s20, 1
      %s26 = ssub.s32 %s20, 2
      %s33 = sadd.s32 1, %s28
      %p34 = scmp.ge.s32.totalorder %s33, 1
      %s35 = scalar_select %p34, 0, %s33
      %s36 = sadd.s32 1, %s27
      %s37 = scalar_select %p34, %s36, %s27
      %p38 = scmp.ge.s32.totalorder %s37, 2
      %s39 = scalar_select %p38, 0, %s37
      %s40 = ssub.s32 %s27, %s39
      %s41 = ssub.s32 %s28, %s35
      %s42 = sor.u32 %s40, %s41
      %p43 = scmp.eq.s32.totalorder %s42, 0
      %s45 = sadd.s32 %s44, 1
      %s46 = scalar_select %p43, %s44, %s45
      %p49 = pneg %p43
      %p50 = scmp.eq.s32.totalorder %s20, 1
      %p51 = por %p49, %p50
      %p52 = scmp.ne.s32.totalorder %s44, %s47
      %p53 = scmp.eq.s32.totalorder %s20, 0
      %p54 = por %p52, %p53
      %p55 = scmp.ne.s32.totalorder %s44, %s47
      %p56 = scmp.eq.s32.totalorder %s25, 1
      %p57 = por %p55, %p56
      %p58 = scmp.ne.s32.totalorder %s47, %s48
      %p59 = scmp.eq.s32.totalorder %s25, 0
      %p60 = por %p58, %p59
      %p61 = scmp.ne.s32.totalorder %s47, %s48
      %p62 = scmp.eq.s32.totalorder %s26, 1
      %p63 = por %p61, %p62
      %p65 = scmp.ne.s32.totalorder %s48, %s64
      %p66 = scmp.eq.s32.totalorder %s26, 0
      %p67 = por %p65, %p66
      %s68 = ssub.s32 %s27, %s39
      %p69 = scmp.eq.s32.totalorder %s68, 0
      %s71 = sadd.s32 %s70, 1
      %s72 = scalar_select %p69, %s70, %s71
      %p75 = pneg %p69
      %p76 = scmp.eq.s32.totalorder %s20, 1
      %p77 = por %p75, %p76
      %p78 = scmp.ne.s32.totalorder %s70, %s73
      %p79 = scmp.eq.s32.totalorder %s20, 0
      %p80 = por %p78, %p79
      %p81 = scmp.ne.s32.totalorder %s70, %s73
      %p82 = scmp.eq.s32.totalorder %s25, 1
      %p83 = por %p81, %p82
      %p84 = scmp.ne.s32.totalorder %s73, %s74
      %p85 = scmp.eq.s32.totalorder %s25, 0
      %p86 = por %p84, %p85
      %p87 = scmp.ne.s32.totalorder %s73, %s74
      %p88 = scmp.eq.s32.totalorder %s26, 1
      %p89 = por %p87, %p88
      %p91 = scmp.ne.s32.totalorder %s74, %s90
      %p92 = scmp.eq.s32.totalorder %s26, 0
      %p93 = por %p91, %p92
      %s95 = sadd.s32 %s94, 1
      %p98 = scmp.eq.s32.totalorder %s20, 1
      %p99 = scmp.ne.s32.totalorder %s94, %s96
      %p100 = scmp.eq.s32.totalorder %s20, 0
      %p101 = por %p99, %p100
      %p102 = scmp.ne.s32.totalorder %s94, %s96
      %p103 = scmp.eq.s32.totalorder %s25, 1
      %p104 = por %p102, %p103
      %p105 = scmp.ne.s32.totalorder %s96, %s97
      %p106 = scmp.eq.s32.totalorder %s25, 0
      %p107 = por %p105, %p106
      %p108 = scmp.ne.s32.totalorder %s96, %s97
      %p109 = scmp.eq.s32.totalorder %s26, 1
      %p110 = por %p108, %p109
      %p112 = scmp.ne.s32.totalorder %s97, %s111
      %p113 = scmp.eq.s32.totalorder %s26, 0
      %p114 = por %p112, %p113
      %s116 = sadd.s32 %s115, 1
      %p119 = scmp.eq.s32.totalorder %s20, 1
      %p120 = scmp.ne.s32.totalorder %s115, %s117
      %p121 = scmp.eq.s32.totalorder %s20, 0
      %p122 = por %p120, %p121
      %p123 = scmp.ne.s32.totalorder %s115, %s117
      %p124 = scmp.eq.s32.totalorder %s25, 1
      %p125 = por %p123, %p124
      %p126 = scmp.ne.s32.totalorder %s117, %s118
      %p127 = scmp.eq.s32.totalorder %s25, 0
      %p128 = por %p126, %p127
      %p129 = scmp.ne.s32.totalorder %s117, %s118
      %p130 = scmp.eq.s32.totalorder %s26, 1
      %p131 = por %p129, %p130
      %p133 = scmp.ne.s32.totalorder %s118, %s132
      %p134 = scmp.eq.s32.totalorder %s26, 0
      %p135 = por %p133, %p134
      %s137 = sadd.s32 %s136, 1
      %p140 = scmp.eq.s32.totalorder %s20, 1
      %p141 = scmp.ne.s32.totalorder %s136, %s138
      %p142 = scmp.eq.s32.totalorder %s20, 0
      %p143 = por %p141, %p142
      %p144 = scmp.ne.s32.totalorder %s136, %s138
      %p145 = scmp.eq.s32.totalorder %s25, 1
      %p146 = por %p144, %p145
      %p147 = scmp.ne.s32.totalorder %s138, %s139
      %p148 = scmp.eq.s32.totalorder %s25, 0
      %p149 = por %p147, %p148
      %p150 = scmp.ne.s32.totalorder %s138, %s139
      %p151 = scmp.eq.s32.totalorder %s26, 1
      %p152 = por %p150, %p151
      %p154 = scmp.ne.s32.totalorder %s139, %s153
      %p155 = scmp.eq.s32.totalorder %s26, 0
      %p156 = por %p154, %p155
      %s158 = sadd.s32 %s157, 1
      %p161 = scmp.eq.s32.totalorder %s20, 1
      %p162 = scmp.ne.s32.totalorder %s157, %s159
      %p163 = scmp.eq.s32.totalorder %s20, 0
      %p164 = por %p162, %p163
      %p165 = scmp.ne.s32.totalorder %s157, %s159
      %p166 = scmp.eq.s32.totalorder %s25, 1
      %p167 = por %p165, %p166
      %p168 = scmp.ne.s32.totalorder %s159, %s160
      %p169 = scmp.eq.s32.totalorder %s25, 0
      %p170 = por %p168, %p169
      %p171 = scmp.ne.s32.totalorder %s159, %s160
      %p172 = scmp.eq.s32.totalorder %s26, 1
      %p173 = por %p171, %p172
      %p175 = scmp.ne.s32.totalorder %s160, %s174
      %p176 = scmp.eq.s32.totalorder %s26, 0
      %p177 = por %p175, %p176
      %s178 = ssub.s32 %s27, %s39
      %p179 = scmp.eq.s32.totalorder %s178, 0
      %s181 = sadd.s32 %s180, 1
      %s182 = scalar_select %p179, %s180, %s181
      %p185 = pneg %p179
      %p186 = scmp.eq.s32.totalorder %s20, 1
      %p187 = por %p185, %p186
      %p188 = scmp.ne.s32.totalorder %s180, %s183
      %p189 = scmp.eq.s32.totalorder %s20, 0
      %p190 = por %p188, %p189
      %p191 = scmp.ne.s32.totalorder %s180, %s183
      %p192 = scmp.eq.s32.totalorder %s25, 1
      %p193 = por %p191, %p192
      %p194 = scmp.ne.s32.totalorder %s183, %s184
      %p195 = scmp.eq.s32.totalorder %s25, 0
      %p196 = por %p194, %p195
      %p197 = scmp.ne.s32.totalorder %s183, %s184
      %p198 = scmp.eq.s32.totalorder %s26, 1
      %p199 = por %p197, %p198
      %p201 = scmp.ne.s32.totalorder %s184, %s200
      %p202 = scmp.eq.s32.totalorder %s26, 0
      %p203 = por %p201, %p202
      %p204 = scmp.le.s32.totalorder 1, %s20
      %p205 = scmp.lt.s32.totalorder %s20, 3
      %p206 = pnand %p204, %p205
      %p207 = pneg %p206
      // Predicated region
      $region9: #{tpu_custom_call.1} parent=5 // pred_check
        _
      $region10: #{tpu_custom_call.1} parent=5 // pred_check_branch
        %209 = sbr.rel (%p206) target = $region12
      $region11: #{tpu_custom_call.1} parent=5 // pred_region
        %s210 = ssub.s32 %s20, 1
        // Predicated region
        $region13: #{tpu_custom_call.1} parent=11 // pred_check
          %p211 = pneg %p86
        $region14: #{tpu_custom_call.1} parent=11 // pred_check_branch
          %213 = sbr.rel (%p211) target = $region16
        $region15: #{tpu_custom_call.1} parent=11 // pred_region
          %s215 = ssub.s32 1024, 1024
          %216 = vsyncadd [#allocation6], %s215
          %s217 = smul.addr %s29, 16
          %s218 = smul.addr %s217, 64
          %s219 = scalar_lea.hbm %s1, %s218
          %s220 = sshll.u32 [#allocation5], 4
          %s221 = int_to_ptr.vmem [resolvable:$true] %s220
          %226 = dma.hbm_to_vmem [thread:$0]  %s219, 1024, %s221, [#allocation6], 64, 64, 4
        $region16: #{tpu_custom_call.1} parent=11 // pred_fallthru
          _
        // Predicated region
        $region17: #{tpu_custom_call.1} parent=11 // pred_check
          %p227 = pneg %p107
        $region18: #{tpu_custom_call.1} parent=11 // pred_check_branch
          %229 = sbr.rel (%p227) target = $region20
        $region19: #{tpu_custom_call.1} parent=11 // pred_region
          %s231 = ssub.s32 1024, 1024
          %232 = vsyncadd [#allocation6], %s231
          %s233 = sshll.u32 [#allocation7], 4
          %s234 = int_to_ptr.vmem [resolvable:$true] %s233
          %239 = dma.hbm_to_vmem [thread:$0]  %s2, 1024, %s234, [#allocation6], 64, 64, 4
        $region20: #{tpu_custom_call.1} parent=11 // pred_fallthru
          _
        // Predicated region
        $region21: #{tpu_custom_call.1} parent=11 // pred_check
          %p240 = pneg %p128
        $region22: #{tpu_custom_call.1} parent=11 // pred_check_branch
          %242 = sbr.rel (%p240) target = $region24
        $region23: #{tpu_custom_call.1} parent=11 // pred_region
          _
        $region24: #{tpu_custom_call.1} parent=11 // pred_fallthru
          _
        // Predicated region
        $region25: #{tpu_custom_call.1} parent=11 // pred_check
          %p243 = pneg %p149
        $region26: #{tpu_custom_call.1} parent=11 // pred_check_branch
          %245 = sbr.rel (%p243) target = $region28
        $region27: #{tpu_custom_call.1} parent=11 // pred_region
          %s247 = ssub.s32 2048, 2048
          %248 = vsyncadd [#allocation9], %s247
          %s249 = sshll.u32 [#allocation8], 4
          %s250 = int_to_ptr.vmem [resolvable:$true] %s249
          %255 = dma.hbm_to_vmem [thread:$0]  %s4, 2048, %s250, [#allocation9], 64, 64, 4
        $region28: #{tpu_custom_call.1} parent=11 // pred_fallthru
          _
        // Predicated region
        $region29: #{tpu_custom_call.1} parent=11 // pred_check
          %p256 = pneg %p170
        $region30: #{tpu_custom_call.1} parent=11 // pred_check_branch
          %258 = sbr.rel (%p256) target = $region32
        $region31: #{tpu_custom_call.1} parent=11 // pred_region
          _
        $region32: #{tpu_custom_call.1} parent=11 // pred_fallthru
          _
      $region12: #{tpu_custom_call.1} parent=5 // pred_fallthru
        _
      %p259 = scmp.lt.s32.totalorder %s20, 2
      // Predicated region
      $region33: #{tpu_custom_call.1} parent=5 // pred_check
        %p260 = pneg %p259
      $region34: #{tpu_custom_call.1} parent=5 // pred_check_branch
        %262 = sbr.rel (%p260) target = $region36
      $region35: #{tpu_custom_call.1} parent=5 // pred_region
        // Predicated region
        $region37: #{tpu_custom_call.1} parent=35 // pred_check
          %p263 = pneg %p54
        $region38: #{tpu_custom_call.1} parent=35 // pred_check_branch
          %265 = sbr.rel (%p263) target = $region40
        $region39: #{tpu_custom_call.1} parent=35 // pred_region
          %s266 = sand.u32 %s44, 1
          %s267 = scalar_lea.sflag [#allocation3], %s266
          %s268 = sand.u32 %s44, 1
          %s269 = smul.addr %s268, 8
          %s270 = scalar_lea.vmem [#allocation2], %s269
          %s272 = ssub.s32 128, 128
          %273 = vsyncadd %s267, %s272
          %s274 = sadd.s32 %s28, %s27
          %s275 = smul.addr %s274, 128
          %s276 = scalar_lea.hbm %s0, %s275
          %s278 = sshll.u32 %s270, 4
          %s279 = int_to_ptr.vmem [resolvable:$true] %s278
          %281 = dma.hbm_to_vmem [thread:$0]  %s276, 128, %s279, %s267
        $region40: #{tpu_custom_call.1} parent=35 // pred_fallthru
          _
      $region36: #{tpu_custom_call.1} parent=5 // pred_fallthru
        _
      %p282 = scmp.le.s32.totalorder 1, %s20
      %p283 = scmp.lt.s32.totalorder %s20, 3
      %p284 = pnand %p282, %p283
      %p285 = pneg %p284
      // Predicated region
      $region41: #{tpu_custom_call.1} parent=5 // pred_check
        _
      $region42: #{tpu_custom_call.1} parent=5 // pred_check_branch
        %287 = sbr.rel (%p284) target = $region44
      $region43: #{tpu_custom_call.1} parent=5 // pred_region
        %s288 = ssub.s32 %s20, 1
        %s289 = sand.u32 %s47, 1
        %s290 = scalar_lea.sflag [#allocation3], %s289
        %s291 = sand.u32 %s47, 1
        %s292 = smul.addr %s291, 8
        %s293 = scalar_lea.vmem [#allocation2], %s292
        // Predicated region
        $region45: #{tpu_custom_call.1} parent=43 // pred_check
          %p294 = pneg %p60
        $region46: #{tpu_custom_call.1} parent=43 // pred_check_branch
          %296 = sbr.rel (%p294) target = $region48
        $region47: #{tpu_custom_call.1} parent=43 // pred_region
          %297 = dma.done %s290, 128
        $region48: #{tpu_custom_call.1} parent=43 // pred_fallthru
          _
        // Predicated region
        $region49: #{tpu_custom_call.1} parent=43 // pred_check
          %p298 = pneg %p86
        $region50: #{tpu_custom_call.1} parent=43 // pred_check_branch
          %300 = sbr.rel (%p298) target = $region52
        $region51: #{tpu_custom_call.1} parent=43 // pred_region
          %301 = dma.done [#allocation6], 1024
        $region52: #{tpu_custom_call.1} parent=43 // pred_fallthru
          _
        // Predicated region
        $region53: #{tpu_custom_call.1} parent=43 // pred_check
          %p302 = pneg %p107
        $region54: #{tpu_custom_call.1} parent=43 // pred_check_branch
          %304 = sbr.rel (%p302) target = $region56
        $region55: #{tpu_custom_call.1} parent=43 // pred_region
          %305 = dma.done [#allocation6], 1024
        $region56: #{tpu_custom_call.1} parent=43 // pred_fallthru
          _
        // Predicated region
        $region57: #{tpu_custom_call.1} parent=43 // pred_check
          %p306 = pneg %p149
        $region58: #{tpu_custom_call.1} parent=43 // pred_check_branch
          %308 = sbr.rel (%p306) target = $region60
        $region59: #{tpu_custom_call.1} parent=43 // pred_region
          %309 = dma.done [#allocation9], 2048
        $region60: #{tpu_custom_call.1} parent=43 // pred_fallthru
          _
        %s310 = sand.u32 %s47, 1
        %s311 = scalar_lea.sflag [#allocation3], %s310
        %s312 = sand.u32 %s47, 1
        %s313 = smul.addr %s312, 8
        %s314 = scalar_lea.vmem [#allocation2], %s313
        %p315 = pneg %p60
        %p316 = pneg %p57
        %p317 = pneg %p86
        %p318 = pneg %p83
        %p319 = pneg %p107
        %p320 = pneg %p104
        %p321 = pneg %p128
        %p322 = pneg %p125
        %p323 = pneg %p149
        %p324 = pneg %p146
        %p325 = pneg %p170
        %p326 = pneg %p167
        %p327 = pneg %p196
        %p328 = pneg %p193
        %s329 = sand.u32 %s183, 1
        %s330 = scalar_lea.sflag [#allocation4], %s329
        %s331 = sand.u32 %s183, 1
        %s332 = smul.addr %s331, 128
        %s333 = scalar_lea.vmem [#allocation10], %s332
        %p335 = scmp.eq.s32.totalorder %s30, 0
        // Predicated region
        $region61: #{tpu_custom_call.1} parent=43 // pred_check
          %p336 = pneg %p335
        $region62: #{tpu_custom_call.1} parent=43 // pred_check_branch
          %338 = sbr.rel (%p336) target = $region64
        $region63: #{tpu_custom_call.1} parent=43 // pred_region
          %339 = vst [vmem:[%s333] sm:$0xff] 0.0
          %340 = vst [vmem:[%s333 + $0x8] sm:$0xff] 0.0
          %341 = vst [vmem:[%s333 + $0x10] sm:$0xff] 0.0
          %342 = vst [vmem:[%s333 + $0x18] sm:$0xff] 0.0
          %343 = vst [vmem:[%s333 + $0x20] sm:$0xff] 0.0
          %344 = vst [vmem:[%s333 + $0x28] sm:$0xff] 0.0
          %345 = vst [vmem:[%s333 + $0x30] sm:$0xff] 0.0
          %346 = vst [vmem:[%s333 + $0x38] sm:$0xff] 0.0
          %347 = vst [vmem:[%s333 + $0x40] sm:$0xff] 0.0
          %348 = vst [vmem:[%s333 + $0x48] sm:$0xff] 0.0
          %349 = vst [vmem:[%s333 + $0x50] sm:$0xff] 0.0
          %350 = vst [vmem:[%s333 + $0x58] sm:$0xff] 0.0
          %351 = vst [vmem:[%s333 + $0x60] sm:$0xff] 0.0
          %352 = vst [vmem:[%s333 + $0x68] sm:$0xff] 0.0
          %353 = vst [vmem:[%s333 + $0x70] sm:$0xff] 0.0
          %354 = vst [vmem:[%s333 + $0x78] sm:$0xff] 0.0
        $region64: #{tpu_custom_call.1} parent=43 // pred_fallthru
          _
        %v355 = vld [vmem:[#allocation7] sm:$0xf]
        %v356 = vld [vmem:[#allocation7 + $0x4] sm:$0xf]
        %v357 = vld [vmem:[#allocation7 + $0x8] sm:$0xf]
        %v358 = vld [vmem:[#allocation7 + $0xc] sm:$0xf]
        %v359 = vld [vmem:[#allocation7 + $0x10] sm:$0xf]
        %v360 = vld [vmem:[#allocation7 + $0x14] sm:$0xf]
        %v361 = vld [vmem:[#allocation7 + $0x18] sm:$0xf]
        %v362 = vld [vmem:[#allocation7 + $0x1c] sm:$0xf]
        %v363 = vld [vmem:[#allocation7 + $0x20] sm:$0xf]
        %v364 = vld [vmem:[#allocation7 + $0x24] sm:$0xf]
        %v365 = vld [vmem:[#allocation7 + $0x28] sm:$0xf]
        %v366 = vld [vmem:[#allocation7 + $0x2c] sm:$0xf]
        %v367 = vld [vmem:[#allocation7 + $0x30] sm:$0xf]
        %v368 = vld [vmem:[#allocation7 + $0x34] sm:$0xf]
        %v369 = vld [vmem:[#allocation7 + $0x38] sm:$0xf]
        %v370 = vld [vmem:[#allocation7 + $0x3c] sm:$0xf]
        %v371 = vld [vmem:[%s3] sm:$0x1]
        %v372 = vld [vmem:[%s293] sm:$0xff]
        %v373 = vunpack.c.l.s8.bf16 %v372
        %v374 = vunpack.c.h.s8.bf16 %v372
        %v375 = vsub.bf16 0, %v373
        %v376 = vsub.bf16 0, %v374
        %v377 = vmax.bf16 %v375, 0
        %v378 = vmax.bf16 %v376, 0
        %v379 = vmax.bf16 %v373, 0
        %v380 = vmax.bf16 %v374, 0
        %v381 = vunpack.c.l.bf16 %v377
        %v382 = vunpack.c.h.bf16 %v377
        %v383 = vunpack.c.l.bf16 %v378
        %v384 = vunpack.c.h.bf16 %v378
        %385 = vadd.xlane.f32.xlu0 %v381
        %v386 = vpop.xlane.xlu0 %385
        %387 = vadd.xlane.f32.xlu0 %v382
        %v388 = vpop.xlane.xlu0 %387
        %389 = vadd.xlane.f32.xlu0 %v383
        %v390 = vpop.xlane.xlu0 %389
        %391 = vadd.xlane.f32.xlu0 %v384
        %v392 = vpop.xlane.xlu0 %391
        %v393 = vmax.f32 %v386, 1.0
        %v394 = vmax.f32 %v388, 1.0
        %v395 = vmax.f32 %v390, 1.0
        %v396 = vmax.f32 %v392, 1.0
        %v397 = vrcp.pop %v393
        %v398 = vrcp.pop %v394
        %v399 = vrcp.pop %v395
        %v400 = vrcp.pop %v396
        %v401 = vld [vmem:[#allocation5] sm:$0xf]
        %v402 = vld [vmem:[#allocation5 + $0x4] sm:$0xf]
        %v403 = vld [vmem:[#allocation5 + $0x8] sm:$0xf]
        %v404 = vld [vmem:[#allocation5 + $0xc] sm:$0xf]
        %v405 = vld [vmem:[#allocation5 + $0x10] sm:$0xf]
        %v406 = vld [vmem:[#allocation5 + $0x14] sm:$0xf]
        %v407 = vld [vmem:[#allocation5 + $0x18] sm:$0xf]
        %v408 = vld [vmem:[#allocation5 + $0x1c] sm:$0xf]
        %v409 = vld [vmem:[#allocation5 + $0x20] sm:$0xf]
        %v410 = vld [vmem:[#allocation5 + $0x24] sm:$0xf]
        %v411 = vld [vmem:[#allocation5 + $0x28] sm:$0xf]
        %v412 = vld [vmem:[#allocation5 + $0x2c] sm:$0xf]
        %v413 = vld [vmem:[#allocation5 + $0x30] sm:$0xf]
        %v414 = vld [vmem:[#allocation5 + $0x34] sm:$0xf]
        %v415 = vld [vmem:[#allocation5 + $0x38] sm:$0xf]
        %v416 = vld [vmem:[#allocation5 + $0x3c] sm:$0xf]
        %v433 = vunpack.c.l.b16 %v401
        %v434 = vunpack.c.l.b16 %v402
        %v435 = vunpack.c.l.b16 %v403
        %v436 = vunpack.c.l.b16 %v404
        %v437 = vunpack.c.l.b16 %v405
        %v438 = vunpack.c.l.b16 %v406
        %v439 = vunpack.c.l.b16 %v407
        %v440 = vunpack.c.l.b16 %v408
        %v441 = vunpack.c.l.b16 %v409
        %v442 = vunpack.c.l.b16 %v410
        %v443 = vunpack.c.l.b16 %v411
        %v444 = vunpack.c.l.b16 %v412
        %v445 = vunpack.c.l.b16 %v413
        %v446 = vunpack.c.l.b16 %v414
        %v447 = vunpack.c.l.b16 %v415
        %v448 = vunpack.c.l.b16 %v416
        %v449 = vpack.c.b16 %v434, %v433
        %v450 = vpack.c.b16 %v436, %v435
        %v451 = vpack.c.b16 %v438, %v437
        %v452 = vpack.c.b16 %v440, %v439
        %v453 = vpack.c.b16 %v442, %v441
        %v454 = vpack.c.b16 %v444, %v443
        %v455 = vpack.c.b16 %v446, %v445
        %v456 = vpack.c.b16 %v448, %v447
        %465 = vmatprep.subr.bf16.mxu0 0
        %466 = vmatpush1.bf16.msra.mxu0 %v449
        %467 = vmatprep.subr.bf16.mxu0 0
        %468 = vmatpush1.bf16.msra.mxu0 %v450
        %469 = vmatprep.subr.bf16.mxu0 0
        %470 = vmatpush1.bf16.msra.mxu0 %v451
        %471 = vmatprep.subr.bf16.mxu0 0
        %472 = vmatpush1.bf16.msra.mxu0 %v452
        %473 = vmatprep.subr.bf16.mxu0 0
        %474 = vmatpush1.bf16.msra.mxu0 %v453
        %475 = vmatprep.subr.bf16.mxu0 0
        %476 = vmatpush1.bf16.msra.mxu0 %v454
        %477 = vmatprep.subr.bf16.mxu0 0
        %478 = vmatpush1.bf16.msra.mxu0 %v455
        %479 = vmatprep.subr.bf16.mxu0 0
        %480 = vmatpush1.bf16.msra.mxu0 %v456
        %481 = vmatprep.subr.bf16.mxu0 0
        %482 = vmatpush1.bf16.msra.mxu0 0
        %483 = vmatprep.subr.bf16.mxu0 0
        %484 = vmatpush1.bf16.msra.mxu0 0
        %485 = vmatprep.subr.bf16.mxu0 0
        %486 = vmatpush1.bf16.msra.mxu0 0
        %487 = vmatprep.subr.bf16.mxu0 0
        %488 = vmatpush1.bf16.msra.mxu0 0
        %489 = vmatprep.subr.bf16.mxu0 0
        %490 = vmatpush1.bf16.msra.mxu0 0
        %491 = vmatprep.subr.bf16.mxu0 0
        %492 = vmatpush1.bf16.msra.mxu0 0
        %493 = vmatprep.subr.bf16.mxu0 0
        %494 = vmatpush1.bf16.msra.mxu0 0
        %495 = vmatprep.subr.bf16.mxu0 0
        %496 = vmatpush1.bf16.msra.mxu0 0
        %497 = vmatprep.mubr.bf16.mxu0 0
        %498 = vmatmul.mubr.bf16.gmra.mrb[0].mxu0 %v377
        %v499 = vpop.f32.mrb[0].mxu0
        %v500 = vadd.f32 0.0, %v499
        %v501 = vpop.f32.mrb[0].mxu0
        %v502 = vpop.f32.mrb[0].mxu0
        %v503 = vadd.f32 0.0, %v502
        %v504 = vpop.f32.mrb[0].mxu0
        %505 = vmatprep.mubr.bf16.mxu0 0
        %506 = vmatmul.mubr.bf16.gmra.mrb[0].mxu0 %v378
        %v507 = vpop.f32.mrb[0].mxu0
        %v508 = vadd.f32 0.0, %v507
        %v509 = vpop.f32.mrb[0].mxu0
        %v510 = vpop.f32.mrb[0].mxu0
        %v511 = vadd.f32 0.0, %v510
        %v512 = vpop.f32.mrb[0].mxu0
        %513 = vdwg.mxu0
        %v514 = vmul.f32 %v500, %v397
        %v515 = vmul.f32 %v503, %v398
        %v516 = vmul.f32 %v508, %v399
        %v517 = vmul.f32 %v511, %v400
        %v518 = vpack.c.bf16 %v515, %v514
        %v519 = vpack.c.bf16 %v517, %v516
        %v521 = vlaneseq
        %v522 = vshrl.u32 %v521, 7
        %v523 = vsub.s32 0, %v522
        %v524 = vrot.slane %v371, %v523
        %v542 = vunpack.c.l.b16 %v355
        %v543 = vunpack.c.l.b16 %v356
        %v544 = vunpack.c.l.b16 %v357
        %v545 = vunpack.c.l.b16 %v358
        %v546 = vunpack.c.l.b16 %v359
        %v547 = vunpack.c.l.b16 %v360
        %v548 = vunpack.c.l.b16 %v361
        %v549 = vunpack.c.l.b16 %v362
        %v550 = vunpack.c.l.b16 %v363
        %v551 = vunpack.c.l.b16 %v364
        %v552 = vunpack.c.l.b16 %v365
        %v553 = vunpack.c.l.b16 %v366
        %v554 = vunpack.c.l.b16 %v367
        %v555 = vunpack.c.l.b16 %v368
        %v556 = vunpack.c.l.b16 %v369
        %v557 = vunpack.c.l.b16 %v370
        %v558 = vpack.c.b16 %v543, %v542
        %v559 = vpack.c.b16 %v545, %v544
        %v560 = vpack.c.b16 %v547, %v546
        %v561 = vpack.c.b16 %v549, %v548
        %v562 = vpack.c.b16 %v551, %v550
        %v563 = vpack.c.b16 %v553, %v552
        %v564 = vpack.c.b16 %v555, %v554
        %v565 = vpack.c.b16 %v557, %v556
        %574 = vmatprep.subr.bf16.mxu0 0
        %575 = vmatpush1.bf16.msra.mxu0 %v558
        %576 = vmatprep.subr.bf16.mxu0 0
        %577 = vmatpush1.bf16.msra.mxu0 %v559
        %578 = vmatprep.subr.bf16.mxu0 0
        %579 = vmatpush1.bf16.msra.mxu0 %v560
        %580 = vmatprep.subr.bf16.mxu0 0
        %581 = vmatpush1.bf16.msra.mxu0 %v561
        %582 = vmatprep.subr.bf16.mxu0 0
        %583 = vmatpush1.bf16.msra.mxu0 %v562
        %584 = vmatprep.subr.bf16.mxu0 0
        %585 = vmatpush1.bf16.msra.mxu0 %v563
        %586 = vmatprep.subr.bf16.mxu0 0
        %587 = vmatpush1.bf16.msra.mxu0 %v564
        %588 = vmatprep.subr.bf16.mxu0 0
        %589 = vmatpush1.bf16.msra.mxu0 %v565
        %590 = vmatprep.subr.bf16.mxu0 0
        %591 = vmatpush1.bf16.msra.mxu0 0
        %592 = vmatprep.subr.bf16.mxu0 0
        %593 = vmatpush1.bf16.msra.mxu0 0
        %594 = vmatprep.subr.bf16.mxu0 0
        %595 = vmatpush1.bf16.msra.mxu0 0
        %596 = vmatprep.subr.bf16.mxu0 0
        %597 = vmatpush1.bf16.msra.mxu0 0
        %598 = vmatprep.subr.bf16.mxu0 0
        %599 = vmatpush1.bf16.msra.mxu0 0
        %600 = vmatprep.subr.bf16.mxu0 0
        %601 = vmatpush1.bf16.msra.mxu0 0
        %602 = vmatprep.subr.bf16.mxu0 0
        %603 = vmatpush1.bf16.msra.mxu0 0
        %604 = vmatprep.subr.bf16.mxu0 0
        %605 = vmatpush1.bf16.msra.mxu0 0
        %606 = vmatprep.mubr.bf16.mxu0 0
        %607 = vmatmul.mubr.bf16.gmra.mrb[0].mxu0 %v518
        %v608 = vpop.f32.mrb[0].mxu0
        %v609 = vadd.f32 %v524, %v608
        %v610 = vpop.f32.mrb[0].mxu0
        %v611 = vpop.f32.mrb[0].mxu0
        %v612 = vadd.f32 %v524, %v611
        %v613 = vpop.f32.mrb[0].mxu0
        %614 = vmatprep.mubr.bf16.mxu0 0
        %615 = vmatmul.mubr.bf16.gmra.mrb[0].mxu0 %v519
        %v616 = vpop.f32.mrb[0].mxu0
        %v617 = vadd.f32 %v524, %v616
        %v618 = vpop.f32.mrb[0].mxu0
        %v619 = vpop.f32.mrb[0].mxu0
        %v620 = vadd.f32 %v524, %v619
        %v621 = vpop.f32.mrb[0].mxu0
        %622 = vdwg.mxu0
        %v623 = vmax.f32 %v609, 0.0
        %v624 = vmax.f32 %v612, 0.0
        %v625 = vmax.f32 %v617, 0.0
        %v626 = vmax.f32 %v620, 0.0
        %v627 = vpack.c.bf16 %v624, %v623
        %v628 = vpack.c.bf16 %v626, %v625
        %629 = vxpose.xlu0.c.b16.start [1/8] %v379, 128
        %630 = vxpose.xlu0.c.b16.cont [2/8] %v380, 128
        %631 = vxpose.xlu0.c.b16.cont [3/8] 0, 128
        %632 = vxpose.xlu0.c.b16.cont [4/8] 0, 128
        %633 = vxpose.xlu0.c.b16.cont [5/8] 0, 128
        %634 = vxpose.xlu0.c.b16.cont [6/8] 0, 128
        %635 = vxpose.xlu0.c.b16.cont [7/8] 0, 128
        %636 = vxpose.xlu0.c.b16.end [8/8] 0, 128
        %v637 = vpop.trf.xlu0
        %v638 = vpop.trf.xlu0
        %v639 = vpop.trf.xlu0
        %v640 = vpop.trf.xlu0
        %v641 = vpop.trf.xlu0
        %v642 = vpop.trf.xlu0
        %v643 = vpop.trf.xlu0
        %v644 = vpop.trf.xlu0
        %vm645 = vcmask 261120
        %v647 = vsel %vm645, %v637, 0
        %v650 = vsel %vm645, %v638, 0
        %v653 = vsel %vm645, %v639, 0
        %v656 = vsel %vm645, %v640, 0
        %v659 = vsel %vm645, %v641, 0
        %v662 = vsel %vm645, %v642, 0
        %v665 = vsel %vm645, %v643, 0
        %v668 = vsel %vm645, %v644, 0
        %670 = vmatprep.subr.bf16.mxu0 0
        %671 = vmatpush1.bf16.msra.mxu0 %v627
        %672 = vmatprep.subr.bf16.mxu0 0
        %673 = vmatpush1.bf16.msra.mxu0 %v628
        %674 = vmatprep.subr.bf16.mxu0 0
        %675 = vmatpush1.bf16.msra.mxu0 0
        %676 = vmatprep.subr.bf16.mxu0 0
        %677 = vmatpush1.bf16.msra.mxu0 0
        %678 = vmatprep.subr.bf16.mxu0 0
        %679 = vmatpush1.bf16.msra.mxu0 0
        %680 = vmatprep.subr.bf16.mxu0 0
        %681 = vmatpush1.bf16.msra.mxu0 0
        %682 = vmatprep.subr.bf16.mxu0 0
        %683 = vmatpush1.bf16.msra.mxu0 0
        %684 = vmatprep.subr.bf16.mxu0 0
        %685 = vmatpush1.bf16.msra.mxu0 0
        %686 = vmatprep.subr.bf16.mxu0 0
        %687 = vmatpush1.bf16.msra.mxu0 0
        %688 = vmatprep.subr.bf16.mxu0 0
        %689 = vmatpush1.bf16.msra.mxu0 0
        %690 = vmatprep.subr.bf16.mxu0 0
        %691 = vmatpush1.bf16.msra.mxu0 0
        %692 = vmatprep.subr.bf16.mxu0 0
        %693 = vmatpush1.bf16.msra.mxu0 0
        %694 = vmatprep.subr.bf16.mxu0 0
        %695 = vmatpush1.bf16.msra.mxu0 0
        %696 = vmatprep.subr.bf16.mxu0 0
        %697 = vmatpush1.bf16.msra.mxu0 0
        %698 = vmatprep.subr.bf16.mxu0 0
        %699 = vmatpush1.bf16.msra.mxu0 0
        %700 = vmatprep.subr.bf16.mxu0 0
        %701 = vmatpush1.bf16.msra.mxu0 0
        %702 = vmatprep.mubr.bf16.mxu0 0
        %703 = vmatmul.mubr.bf16.gmra.mrb[0].mxu0 %v647
        %v704 = vpop.f32.mrb[0].mxu0
        %v705 = vadd.f32 0.0, %v704
        %v706 = vpop.f32.mrb[0].mxu0
        %v707 = vpop.f32.mrb[0].mxu0
        %v708 = vadd.f32 0.0, %v707
        %v709 = vpop.f32.mrb[0].mxu0
        %710 = vmatprep.mubr.bf16.mxu0 0
        %711 = vmatmul.mubr.bf16.gmra.mrb[0].mxu0 %v650
        %v712 = vpop.f32.mrb[0].mxu0
        %v713 = vadd.f32 0.0, %v712
        %v714 = vpop.f32.mrb[0].mxu0
        %v715 = vpop.f32.mrb[0].mxu0
        %v716 = vadd.f32 0.0, %v715
        %v717 = vpop.f32.mrb[0].mxu0
        %718 = vmatprep.mubr.bf16.mxu0 0
        %719 = vmatmul.mubr.bf16.gmra.mrb[0].mxu0 %v653
        %v720 = vpop.f32.mrb[0].mxu0
        %v721 = vadd.f32 0.0, %v720
        %v722 = vpop.f32.mrb[0].mxu0
        %v723 = vpop.f32.mrb[0].mxu0
        %v724 = vadd.f32 0.0, %v723
        %v725 = vpop.f32.mrb[0].mxu0
        %726 = vmatprep.mubr.bf16.mxu0 0
        %727 = vmatmul.mubr.bf16.gmra.mrb[0].mxu0 %v656
        %v728 = vpop.f32.mrb[0].mxu0
        %v729 = vadd.f32 0.0, %v728
        %v730 = vpop.f32.mrb[0].mxu0
        %v731 = vpop.f32.mrb[0].mxu0
        %v732 = vadd.f32 0.0, %v731
        %v733 = vpop.f32.mrb[0].mxu0
        %734 = vmatprep.mubr.bf16.mxu0 0
        %735 = vmatmul.mubr.bf16.gmra.mrb[0].mxu0 %v659
        %v736 = vpop.f32.mrb[0].mxu0
        %v737 = vadd.f32 0.0, %v736
        %v738 = vpop.f32.mrb[0].mxu0
        %v739 = vpop.f32.mrb[0].mxu0
        %v740 = vadd.f32 0.0, %v739
        %v741 = vpop.f32.mrb[0].mxu0
        %742 = vmatprep.mubr.bf16.mxu0 0
        %743 = vmatmul.mubr.bf16.gmra.mrb[0].mxu0 %v662
        %v744 = vpop.f32.mrb[0].mxu0
        %v745 = vadd.f32 0.0, %v744
        %v746 = vpop.f32.mrb[0].mxu0
        %v747 = vpop.f32.mrb[0].mxu0
        %v748 = vadd.f32 0.0, %v747
        %v749 = vpop.f32.mrb[0].mxu0
        %750 = vmatprep.mubr.bf16.mxu0 0
        %751 = vmatmul.mubr.bf16.gmra.mrb[0].mxu0 %v665
        %v752 = vpop.f32.mrb[0].mxu0
        %v753 = vadd.f32 0.0, %v752
        %v754 = vpop.f32.mrb[0].mxu0
        %v755 = vpop.f32.mrb[0].mxu0
        %v756 = vadd.f32 0.0, %v755
        %v757 = vpop.f32.mrb[0].mxu0
        %758 = vmatprep.mubr.bf16.mxu0 0
        %759 = vmatmul.mubr.bf16.gmra.mrb[0].mxu0 %v668
        %v760 = vpop.f32.mrb[0].mxu0
        %v761 = vadd.f32 0.0, %v760
        %v762 = vpop.f32.mrb[0].mxu0
        %v763 = vpop.f32.mrb[0].mxu0
        %v764 = vadd.f32 0.0, %v763
        %v765 = vpop.f32.mrb[0].mxu0
        %766 = vdwg.mxu0
        %v767 = vld [vmem:[%s333] sm:$0xff]
        %v768 = vld [vmem:[%s333 + $0x8] sm:$0xff]
        %v769 = vld [vmem:[%s333 + $0x10] sm:$0xff]
        %v770 = vld [vmem:[%s333 + $0x18] sm:$0xff]
        %v771 = vld [vmem:[%s333 + $0x20] sm:$0xff]
        %v772 = vld [vmem:[%s333 + $0x28] sm:$0xff]
        %v773 = vld [vmem:[%s333 + $0x30] sm:$0xff]
        %v774 = vld [vmem:[%s333 + $0x38] sm:$0xff]
        %v775 = vld [vmem:[%s333 + $0x40] sm:$0xff]
        %v776 = vld [vmem:[%s333 + $0x48] sm:$0xff]
        %v777 = vld [vmem:[%s333 + $0x50] sm:$0xff]
        %v778 = vld [vmem:[%s333 + $0x58] sm:$0xff]
        %v779 = vld [vmem:[%s333 + $0x60] sm:$0xff]
        %v780 = vld [vmem:[%s333 + $0x68] sm:$0xff]
        %v781 = vld [vmem:[%s333 + $0x70] sm:$0xff]
        %v782 = vld [vmem:[%s333 + $0x78] sm:$0xff]
        %v783 = vadd.f32 %v767, %v705
        %v784 = vadd.f32 %v768, %v708
        %v785 = vadd.f32 %v769, %v713
        %v786 = vadd.f32 %v770, %v716
        %v787 = vadd.f32 %v771, %v721
        %v788 = vadd.f32 %v772, %v724
        %v789 = vadd.f32 %v773, %v729
        %v790 = vadd.f32 %v774, %v732
        %v791 = vadd.f32 %v775, %v737
        %v792 = vadd.f32 %v776, %v740
        %v793 = vadd.f32 %v777, %v745
        %v794 = vadd.f32 %v778, %v748
        %v795 = vadd.f32 %v779, %v753
        %v796 = vadd.f32 %v780, %v756
        %v797 = vadd.f32 %v781, %v761
        %v798 = vadd.f32 %v782, %v764
        %799 = vst [vmem:[%s333] sm:$0xff] %v783
        %800 = vst [vmem:[%s333 + $0x8] sm:$0xff] %v784
        %801 = vst [vmem:[%s333 + $0x10] sm:$0xff] %v785
        %802 = vst [vmem:[%s333 + $0x18] sm:$0xff] %v786
        %803 = vst [vmem:[%s333 + $0x20] sm:$0xff] %v787
        %804 = vst [vmem:[%s333 + $0x28] sm:$0xff] %v788
        %805 = vst [vmem:[%s333 + $0x30] sm:$0xff] %v789
        %806 = vst [vmem:[%s333 + $0x38] sm:$0xff] %v790
        %807 = vst [vmem:[%s333 + $0x40] sm:$0xff] %v791
        %808 = vst [vmem:[%s333 + $0x48] sm:$0xff] %v792
        %809 = vst [vmem:[%s333 + $0x50] sm:$0xff] %v793
        %810 = vst [vmem:[%s333 + $0x58] sm:$0xff] %v794
        %811 = vst [vmem:[%s333 + $0x60] sm:$0xff] %v795
        %812 = vst [vmem:[%s333 + $0x68] sm:$0xff] %v796
        %813 = vst [vmem:[%s333 + $0x70] sm:$0xff] %v797
        %814 = vst [vmem:[%s333 + $0x78] sm:$0xff] %v798
        // Predicated region
        $region65: #{tpu_custom_call.1} parent=43 // pred_check
          %p815 = pneg %p335
        $region66: #{tpu_custom_call.1} parent=43 // pred_check_branch
          %817 = sbr.rel (%p815) target = $region68
        $region67: #{tpu_custom_call.1} parent=43 // pred_region
          %v818 = vld [vmem:[#allocation8] sm:$0xf]
          %v819 = vld [vmem:[#allocation8 + $0x4] sm:$0xf]
          %v820 = vld [vmem:[#allocation8 + $0x8] sm:$0xf]
          %v821 = vld [vmem:[#allocation8 + $0xc] sm:$0xf]
          %v822 = vld [vmem:[#allocation8 + $0x10] sm:$0xf]
          %v823 = vld [vmem:[#allocation8 + $0x14] sm:$0xf]
          %v824 = vld [vmem:[#allocation8 + $0x18] sm:$0xf]
          %v825 = vld [vmem:[#allocation8 + $0x1c] sm:$0xf]
          %v826 = vld [vmem:[#allocation8 + $0x20] sm:$0xf]
          %v827 = vld [vmem:[#allocation8 + $0x24] sm:$0xf]
          %v828 = vld [vmem:[#allocation8 + $0x28] sm:$0xf]
          %v829 = vld [vmem:[#allocation8 + $0x2c] sm:$0xf]
          %v830 = vld [vmem:[#allocation8 + $0x30] sm:$0xf]
          %v831 = vld [vmem:[#allocation8 + $0x34] sm:$0xf]
          %v832 = vld [vmem:[#allocation8 + $0x38] sm:$0xf]
          %v833 = vld [vmem:[#allocation8 + $0x3c] sm:$0xf]
          %v834 = vld [vmem:[#allocation8 + $0x40] sm:$0xf]
          %v835 = vld [vmem:[#allocation8 + $0x44] sm:$0xf]
          %v836 = vld [vmem:[#allocation8 + $0x48] sm:$0xf]
          %v837 = vld [vmem:[#allocation8 + $0x4c] sm:$0xf]
          %v838 = vld [vmem:[#allocation8 + $0x50] sm:$0xf]
          %v839 = vld [vmem:[#allocation8 + $0x54] sm:$0xf]
          %v840 = vld [vmem:[#allocation8 + $0x58] sm:$0xf]
          %v841 = vld [vmem:[#allocation8 + $0x5c] sm:$0xf]
          %v842 = vld [vmem:[#allocation8 + $0x60] sm:$0xf]
          %v843 = vld [vmem:[#allocation8 + $0x64] sm:$0xf]
          %v844 = vld [vmem:[#allocation8 + $0x68] sm:$0xf]
          %v845 = vld [vmem:[#allocation8 + $0x6c] sm:$0xf]
          %v846 = vld [vmem:[#allocation8 + $0x70] sm:$0xf]
          %v847 = vld [vmem:[#allocation8 + $0x74] sm:$0xf]
          %v848 = vld [vmem:[#allocation8 + $0x78] sm:$0xf]
          %v849 = vld [vmem:[#allocation8 + $0x7c] sm:$0xf]
          %v850 = vld [vmem:[%s5] sm:$0x1]
          %v851 = vld [vmem:[#allocation5] sm:$0xf]
          %v852 = vld [vmem:[#allocation5 + $0x4] sm:$0xf]
          %v853 = vld [vmem:[#allocation5 + $0x8] sm:$0xf]
          %v854 = vld [vmem:[#allocation5 + $0xc] sm:$0xf]
          %v855 = vld [vmem:[#allocation5 + $0x10] sm:$0xf]
          %v856 = vld [vmem:[#allocation5 + $0x14] sm:$0xf]
          %v857 = vld [vmem:[#allocation5 + $0x18] sm:$0xf]
          %v858 = vld [vmem:[#allocation5 + $0x1c] sm:$0xf]
          %v859 = vld [vmem:[#allocation5 + $0x20] sm:$0xf]
          %v860 = vld [vmem:[#allocation5 + $0x24] sm:$0xf]
          %v861 = vld [vmem:[#allocation5 + $0x28] sm:$0xf]
          %v862 = vld [vmem:[#allocation5 + $0x2c] sm:$0xf]
          %v863 = vld [vmem:[#allocation5 + $0x30] sm:$0xf]
          %v864 = vld [vmem:[#allocation5 + $0x34] sm:$0xf]
          %v865 = vld [vmem:[#allocation5 + $0x38] sm:$0xf]
          %v866 = vld [vmem:[#allocation5 + $0x3c] sm:$0xf]
          %v867 = vld [vmem:[%s333] sm:$0xff]
          %v868 = vld [vmem:[%s333 + $0x8] sm:$0xff]
          %v869 = vld [vmem:[%s333 + $0x10] sm:$0xff]
          %v870 = vld [vmem:[%s333 + $0x18] sm:$0xff]
          %v871 = vld [vmem:[%s333 + $0x20] sm:$0xff]
          %v872 = vld [vmem:[%s333 + $0x28] sm:$0xff]
          %v873 = vld [vmem:[%s333 + $0x30] sm:$0xff]
          %v874 = vld [vmem:[%s333 + $0x38] sm:$0xff]
          %v875 = vld [vmem:[%s333 + $0x40] sm:$0xff]
          %v876 = vld [vmem:[%s333 + $0x48] sm:$0xff]
          %v877 = vld [vmem:[%s333 + $0x50] sm:$0xff]
          %v878 = vld [vmem:[%s333 + $0x58] sm:$0xff]
          %v879 = vld [vmem:[%s333 + $0x60] sm:$0xff]
          %v880 = vld [vmem:[%s333 + $0x68] sm:$0xff]
          %v881 = vld [vmem:[%s333 + $0x70] sm:$0xff]
          %v882 = vld [vmem:[%s333 + $0x78] sm:$0xff]
          %v883 = vpack.c.bf16 %v868, %v867
          %v884 = vpack.c.bf16 %v870, %v869
          %v885 = vpack.c.bf16 %v872, %v871
          %v886 = vpack.c.bf16 %v874, %v873
          %v887 = vpack.c.bf16 %v876, %v875
          %v888 = vpack.c.bf16 %v878, %v877
          %v889 = vpack.c.bf16 %v880, %v879
          %v890 = vpack.c.bf16 %v882, %v881
          %v907 = vunpack.c.l.b16 %v851
          %v908 = vunpack.c.l.b16 %v852
          %v909 = vunpack.c.l.b16 %v853
          %v910 = vunpack.c.l.b16 %v854
          %v911 = vunpack.c.l.b16 %v855
          %v912 = vunpack.c.l.b16 %v856
          %v913 = vunpack.c.l.b16 %v857
          %v914 = vunpack.c.l.b16 %v858
          %v915 = vunpack.c.l.b16 %v859
          %v916 = vunpack.c.l.b16 %v860
          %v917 = vunpack.c.l.b16 %v861
          %v918 = vunpack.c.l.b16 %v862
          %v919 = vunpack.c.l.b16 %v863
          %v920 = vunpack.c.l.b16 %v864
          %v921 = vunpack.c.l.b16 %v865
          %v922 = vunpack.c.l.b16 %v866
          %v923 = vpack.c.b16 %v908, %v907
          %v924 = vpack.c.b16 %v910, %v909
          %v925 = vpack.c.b16 %v912, %v911
          %v926 = vpack.c.b16 %v914, %v913
          %v927 = vpack.c.b16 %v916, %v915
          %v928 = vpack.c.b16 %v918, %v917
          %v929 = vpack.c.b16 %v920, %v919
          %v930 = vpack.c.b16 %v922, %v921
          %v940 = vlaneseq
          %v941 = vshrl.u32 %v940, 7
          %v942 = vsub.s32 0, %v941
          %v943 = vrot.slane %v850, %v942
          %v977 = vunpack.c.l.b16 %v818
          %v978 = vunpack.c.l.b16 %v819
          %v979 = vunpack.c.l.b16 %v820
          %v980 = vunpack.c.l.b16 %v821
          %v981 = vunpack.c.l.b16 %v822
          %v982 = vunpack.c.l.b16 %v823
          %v983 = vunpack.c.l.b16 %v824
          %v984 = vunpack.c.l.b16 %v825
          %v985 = vunpack.c.l.b16 %v826
          %v986 = vunpack.c.l.b16 %v827
          %v987 = vunpack.c.l.b16 %v828
          %v988 = vunpack.c.l.b16 %v829
          %v989 = vunpack.c.l.b16 %v830
          %v990 = vunpack.c.l.b16 %v831
          %v991 = vunpack.c.l.b16 %v832
          %v992 = vunpack.c.l.b16 %v833
          %v993 = vunpack.c.l.b16 %v834
          %v994 = vunpack.c.l.b16 %v835
          %v995 = vunpack.c.l.b16 %v836
          %v996 = vunpack.c.l.b16 %v837
          %v997 = vunpack.c.l.b16 %v838
          %v998 = vunpack.c.l.b16 %v839
          %v999 = vunpack.c.l.b16 %v840
          %v1000 = vunpack.c.l.b16 %v841
          %v1001 = vunpack.c.l.b16 %v842
          %v1002 = vunpack.c.l.b16 %v843
          %v1003 = vunpack.c.l.b16 %v844
          %v1004 = vunpack.c.l.b16 %v845
          %v1005 = vunpack.c.l.b16 %v846
          %v1006 = vunpack.c.l.b16 %v847
          %v1007 = vunpack.c.l.b16 %v848
          %v1008 = vunpack.c.l.b16 %v849
          %v1009 = vpack.c.b16 %v978, %v977
          %v1010 = vpack.c.b16 %v980, %v979
          %v1011 = vpack.c.b16 %v982, %v981
          %v1012 = vpack.c.b16 %v984, %v983
          %v1013 = vpack.c.b16 %v986, %v985
          %v1014 = vpack.c.b16 %v988, %v987
          %v1015 = vpack.c.b16 %v990, %v989
          %v1016 = vpack.c.b16 %v992, %v991
          %v1017 = vpack.c.b16 %v994, %v993
          %v1018 = vpack.c.b16 %v996, %v995
          %v1019 = vpack.c.b16 %v998, %v997
          %v1020 = vpack.c.b16 %v1000, %v999
          %v1021 = vpack.c.b16 %v1002, %v1001
          %v1022 = vpack.c.b16 %v1004, %v1003
          %v1023 = vpack.c.b16 %v1006, %v1005
          %v1024 = vpack.c.b16 %v1008, %v1007
          %1041 = vmatprep.subr.bf16.mxu0 0
          %1042 = vmatpush1.bf16.msra.mxu0 %v1009
          %1043 = vmatprep.subr.bf16.mxu0 0
          %1044 = vmatpush1.bf16.msra.mxu0 %v1010
          %1045 = vmatprep.subr.bf16.mxu0 0
          %1046 = vmatpush1.bf16.msra.mxu0 %v1011
          %1047 = vmatprep.subr.bf16.mxu0 0
          %1048 = vmatpush1.bf16.msra.mxu0 %v1012
          %1049 = vmatprep.subr.bf16.mxu0 0
          %1050 = vmatpush1.bf16.msra.mxu0 %v1013
          %1051 = vmatprep.subr.bf16.mxu0 0
          %1052 = vmatpush1.bf16.msra.mxu0 %v1014
          %1053 = vmatprep.subr.bf16.mxu0 0
          %1054 = vmatpush1.bf16.msra.mxu0 %v1015
          %1055 = vmatprep.subr.bf16.mxu0 0
          %1056 = vmatpush1.bf16.msra.mxu0 %v1016
          %1057 = vmatprep.subr.bf16.mxu0 0
          %1058 = vmatpush1.bf16.msra.mxu0 %v1017
          %1059 = vmatprep.subr.bf16.mxu0 0
          %1060 = vmatpush1.bf16.msra.mxu0 %v1018
          %1061 = vmatprep.subr.bf16.mxu0 0
          %1062 = vmatpush1.bf16.msra.mxu0 %v1019
          %1063 = vmatprep.subr.bf16.mxu0 0
          %1064 = vmatpush1.bf16.msra.mxu0 %v1020
          %1065 = vmatprep.subr.bf16.mxu0 0
          %1066 = vmatpush1.bf16.msra.mxu0 %v1021
          %1067 = vmatprep.subr.bf16.mxu0 0
          %1068 = vmatpush1.bf16.msra.mxu0 %v1022
          %1069 = vmatprep.subr.bf16.mxu0 0
          %1070 = vmatpush1.bf16.msra.mxu0 %v1023
          %1071 = vmatprep.subr.bf16.mxu0 0
          %1072 = vmatpush1.bf16.msra.mxu0 %v1024
          %1073 = vmatprep.mubr.bf16.mxu0 %v883
          %1074 = vmatmul.mubr.bf16.gmra.mrb[0].mxu0 %v923
          %v1075 = vpop.f32.mrb[0].mxu0
          %v1076 = vadd.f32 %v943, %v1075
          %v1077 = vpop.f32.mrb[0].mxu0
          %v1078 = vpop.f32.mrb[0].mxu0
          %v1079 = vadd.f32 %v943, %v1078
          %v1080 = vpop.f32.mrb[0].mxu0
          %1081 = vmatprep.mubr.bf16.mxu0 %v884
          %1082 = vmatmul.mubr.bf16.gmra.mrb[0].mxu0 %v924
          %v1083 = vpop.f32.mrb[0].mxu0
          %v1084 = vadd.f32 %v943, %v1083
          %v1085 = vpop.f32.mrb[0].mxu0
          %v1086 = vpop.f32.mrb[0].mxu0
          %v1087 = vadd.f32 %v943, %v1086
          %v1088 = vpop.f32.mrb[0].mxu0
          %1089 = vmatprep.mubr.bf16.mxu0 %v885
          %1090 = vmatmul.mubr.bf16.gmra.mrb[0].mxu0 %v925
          %v1091 = vpop.f32.mrb[0].mxu0
          %v1092 = vadd.f32 %v943, %v1091
          %v1093 = vpop.f32.mrb[0].mxu0
          %v1094 = vpop.f32.mrb[0].mxu0
          %v1095 = vadd.f32 %v943, %v1094
          %v1096 = vpop.f32.mrb[0].mxu0
          %1097 = vmatprep.mubr.bf16.mxu0 %v886
          %1098 = vmatmul.mubr.bf16.gmra.mrb[0].mxu0 %v926
          %v1099 = vpop.f32.mrb[0].mxu0
          %v1100 = vadd.f32 %v943, %v1099
          %v1101 = vpop.f32.mrb[0].mxu0
          %v1102 = vpop.f32.mrb[0].mxu0
          %v1103 = vadd.f32 %v943, %v1102
          %v1104 = vpop.f32.mrb[0].mxu0
          %1105 = vmatprep.mubr.bf16.mxu0 %v887
          %1106 = vmatmul.mubr.bf16.gmra.mrb[0].mxu0 %v927
          %v1107 = vpop.f32.mrb[0].mxu0
          %v1108 = vadd.f32 %v943, %v1107
          %v1109 = vpop.f32.mrb[0].mxu0
          %v1110 = vpop.f32.mrb[0].mxu0
          %v1111 = vadd.f32 %v943, %v1110
          %v1112 = vpop.f32.mrb[0].mxu0
          %1113 = vmatprep.mubr.bf16.mxu0 %v888
          %1114 = vmatmul.mubr.bf16.gmra.mrb[0].mxu0 %v928
          %v1115 = vpop.f32.mrb[0].mxu0
          %v1116 = vadd.f32 %v943, %v1115
          %v1117 = vpop.f32.mrb[0].mxu0
          %v1118 = vpop.f32.mrb[0].mxu0
          %v1119 = vadd.f32 %v943, %v1118
          %v1120 = vpop.f32.mrb[0].mxu0
          %1121 = vmatprep.mubr.bf16.mxu0 %v889
          %1122 = vmatmul.mubr.bf16.gmra.mrb[0].mxu0 %v929
          %v1123 = vpop.f32.mrb[0].mxu0
          %v1124 = vadd.f32 %v943, %v1123
          %v1125 = vpop.f32.mrb[0].mxu0
          %v1126 = vpop.f32.mrb[0].mxu0
          %v1127 = vadd.f32 %v943, %v1126
          %v1128 = vpop.f32.mrb[0].mxu0
          %1129 = vmatprep.mubr.bf16.mxu0 %v890
          %1130 = vmatmul.mubr.bf16.gmra.mrb[0].mxu0 %v930
          %v1131 = vpop.f32.mrb[0].mxu0
          %v1132 = vadd.f32 %v943, %v1131
          %v1133 = vpop.f32.mrb[0].mxu0
          %v1134 = vpop.f32.mrb[0].mxu0
          %v1135 = vadd.f32 %v943, %v1134
          %v1136 = vpop.f32.mrb[0].mxu0
          %1137 = vdwg.mxu0
          %v1138 = vmax.f32 %v1076, 0.0
          %v1139 = vmax.f32 %v1079, 0.0
          %v1140 = vmax.f32 %v1084, 0.0
          %v1141 = vmax.f32 %v1087, 0.0
          %v1142 = vmax.f32 %v1092, 0.0
          %v1143 = vmax.f32 %v1095, 0.0
          %v1144 = vmax.f32 %v1100, 0.0
          %v1145 = vmax.f32 %v1103, 0.0
          %v1146 = vmax.f32 %v1108, 0.0
          %v1147 = vmax.f32 %v1111, 0.0
          %v1148 = vmax.f32 %v1116, 0.0
          %v1149 = vmax.f32 %v1119, 0.0
          %v1150 = vmax.f32 %v1124, 0.0
          %v1151 = vmax.f32 %v1127, 0.0
          %v1152 = vmax.f32 %v1132, 0.0
          %v1153 = vmax.f32 %v1135, 0.0
          %1154 = vst [vmem:[%s333] sm:$0xff] %v1138
          %1155 = vst [vmem:[%s333 + $0x8] sm:$0xff] %v1139
          %1156 = vst [vmem:[%s333 + $0x10] sm:$0xff] %v1140
          %1157 = vst [vmem:[%s333 + $0x18] sm:$0xff] %v1141
          %1158 = vst [vmem:[%s333 + $0x20] sm:$0xff] %v1142
          %1159 = vst [vmem:[%s333 + $0x28] sm:$0xff] %v1143
          %1160 = vst [vmem:[%s333 + $0x30] sm:$0xff] %v1144
          %1161 = vst [vmem:[%s333 + $0x38] sm:$0xff] %v1145
          %1162 = vst [vmem:[%s333 + $0x40] sm:$0xff] %v1146
          %1163 = vst [vmem:[%s333 + $0x48] sm:$0xff] %v1147
          %1164 = vst [vmem:[%s333 + $0x50] sm:$0xff] %v1148
          %1165 = vst [vmem:[%s333 + $0x58] sm:$0xff] %v1149
          %1166 = vst [vmem:[%s333 + $0x60] sm:$0xff] %v1150
          %1167 = vst [vmem:[%s333 + $0x68] sm:$0xff] %v1151
          %1168 = vst [vmem:[%s333 + $0x70] sm:$0xff] %v1152
          %1169 = vst [vmem:[%s333 + $0x78] sm:$0xff] %v1153
        $region68: #{tpu_custom_call.1} parent=43 // pred_fallthru
          _
        %s1170 = sand.u32 %s183, 1
        %s1171 = scalar_lea.sflag [#allocation4], %s1170
        %s1172 = sand.u32 %s183, 1
        %s1173 = smul.addr %s1172, 128
        %s1174 = scalar_lea.vmem [#allocation10], %s1173
        // Predicated region
        $region69: #{tpu_custom_call.1} parent=43 // pred_check
          %p1175 = pneg %p193
        $region70: #{tpu_custom_call.1} parent=43 // pred_check_branch
          %1177 = sbr.rel (%p1175) target = $region72
        $region71: #{tpu_custom_call.1} parent=43 // pred_region
          %s1179 = ssub.s32 2048, 2048
          %1180 = vsyncadd %s1171, %s1179
          %s1181 = smul.addr %s29, 16
          %s1182 = smul.addr %s1181, 128
          %s1183 = scalar_lea.hbm %s6, %s1182
          %s1184 = sshll.u32 %s1174, 4
          %s1185 = int_to_ptr.vmem [resolvable:$true] %s1184
          %1190 = dma.vmem_to_hbm [thread:$0]  %s1185, 2048, %s1183, %s1171, 128, 128, 8
        $region72: #{tpu_custom_call.1} parent=43 // pred_fallthru
          _
      $region44: #{tpu_custom_call.1} parent=5 // pred_fallthru
        _
      %p1191 = scmp.le.s32.totalorder 2, %s20
      // Predicated region
      $region73: #{tpu_custom_call.1} parent=5 // pred_check
        %p1192 = pneg %p1191
      $region74: #{tpu_custom_call.1} parent=5 // pred_check_branch
        %1194 = sbr.rel (%p1192) target = $region76
      $region75: #{tpu_custom_call.1} parent=5 // pred_region
        %s1195 = ssub.s32 %s20, 2
        // Predicated region
        $region77: #{tpu_custom_call.1} parent=75 // pred_check
          %p1196 = pneg %p199
        $region78: #{tpu_custom_call.1} parent=75 // pred_check_branch
          %1198 = sbr.rel (%p1196) target = $region80
        $region79: #{tpu_custom_call.1} parent=75 // pred_region
          %s1199 = sand.u32 %s184, 1
          %s1200 = scalar_lea.sflag [#allocation4], %s1199
          %s1201 = sand.u32 %s184, 1
          %s1202 = smul.addr %s1201, 128
          %s1203 = scalar_lea.vmem [#allocation10], %s1202
          %1204 = dma.done %s1200, 2048
        $region80: #{tpu_custom_call.1} parent=75 // pred_fallthru
          _
      $region76: #{tpu_custom_call.1} parent=5 // pred_fallthru
        _
    $region6: #{tpu_custom_call.1} parent=1 // loop_footer
      %s24 = sadd.s32 1, %s20
    $region7: #{tpu_custom_call.1} parent=1 // loop_footer_branch
      %19 = sbr.rel target = $region3
    $region8: #{tpu_custom_call.1} parent=1 // loop_exit
      _
    %1205 = vsyncpa [#allocation3], 1
    %s1206 = scalar_lea.sflag [#allocation3], 1
    %1207 = vsyncpa %s1206, 1
    %1208 = vsyncpa [#allocation6], 1
    %1209 = vsyncpa [#allocation9], 1
    %1210 = vsyncpa [#allocation4], 1
    %s1211 = scalar_lea.sflag [#allocation4], 1
    %1212 = vsyncpa %s1211, 1

</llo_original>
